<compile_context>
chip_gen: v7x
topology: tpu7x:2x2x1
jax: 0.10.0
libtpu: 0.0.40
codegen_flags: <defaults>
</compile_context>

<pallas_src>
import functools
import math

import jax
import jax.numpy as jnp
from jax import lax
from jax.experimental import pallas as pl
from jax.experimental.pallas import tpu as pltpu

_NCORES = 2  # v7x has 2 TensorCores; harmless (sequential) on v5e/v6e.


def _cdiv(a, b):
    return (a + b - 1) // b


def _round_up(a, m):
    return _cdiv(a, m) * m


def _mse_onehot_kernel(x_ref, t_ref, o_ref, acc_ref, *, num_classes, inv_n):
    """Partial sum of (x - one_hot)^2 over a lane-dense slab, per core."""
    i = pl.program_id(1)  # reduction (arbitrary) axis

    @pl.when(i == 0)
    def _init():
        acc_ref[...] = jnp.zeros_like(acc_ref)

    x = x_ref[...]                              # (bt, slab) f32, lane-dense
    lab = t_ref[...].astype(jnp.int32)          # (bt, slab) expanded labels

    bt, slab = x.shape
    # Per-lane class id: column % num_classes (slab is a multiple of C, so the
    # pattern is exact); built once on a single sublane row and broadcast.
    cls = lax.broadcasted_iota(jnp.int32, (1, slab), 1) % num_classes
    # diff = x - one_hot  ==  (x - 1) where the class matches the label, else x.
    diff = jnp.where(cls == lab, x - 1.0, x)
    sq = diff * diff

    # Deferred reduce: fold sublane-groups with plain vector adds (VPU only);
    # the reshape is tile-aligned (splits the sublane axis by 8), so no copy.
    acc_ref[...] += jnp.sum(sq.reshape(bt // 8, 8, slab), axis=0)

    @pl.when(i == pl.num_programs(1) - 1)
    def _finalize():
        o_ref[...] = jnp.reshape(jnp.sum(acc_ref[...]) * inv_n, (1, 1, 1))


def mse_loss_onehot(x, y, *, num_classes=10, target_block_rows=1024):
    """Pallas implementation of  F.mse_loss(x, one_hot(y, num_classes).float()).

    x : [B, num_classes] float predictions
    y : [B]              int class labels in [0, num_classes)
    returns scalar f32 mean squared error.
    """
    B, C = x.shape
    assert C == num_classes, f"expected {num_classes} classes, got {C}"
    n_total = B * C

    # Lane-dense slab width: lcm(C, 128) -> 640 for C=10.  class = col % C.
    slab = (C * 128) // math.gcd(C, 128)

    # Flat, lane-dense view of x; labels expanded xC along the class axis as
    # int8 (tiny layout plumbing in the wrapper, bulk work stays in the kernel).
    x_flat = x.reshape(-1).astype(jnp.float32)
    t_flat = jnp.repeat(y.astype(jnp.int8), C)

    n_rows = _cdiv(n_total, slab)
    # Row-block per grid step: multiple of 32 (int8 sublane packing), capped at
    # target_block_rows (1024 rows * 640 f32 ~= 2.5 MiB of x per step).
    bt = max(32, min(target_block_rows, _round_up(_cdiv(n_rows, _NCORES), 32)))
    n_steps = _cdiv(n_rows, _NCORES * bt)
    rows_pad = _NCORES * n_steps * bt

    # Pad x with zeros and labels with an invalid class so padded elements
    # contribute exactly 0 -- no in-kernel mask needed.
    pad = rows_pad * slab - n_total
    x_flat = jnp.pad(x_flat, (0, pad))
    t_flat = jnp.pad(t_flat, (0, pad), constant_values=num_classes)
    x2 = x_flat.reshape(rows_pad, slab)
    t2 = t_flat.reshape(rows_pad, slab)

    kernel = functools.partial(
        _mse_onehot_kernel, num_classes=C, inv_n=1.0 / float(n_total)
    )

    def row_map(c, i):
        return (c * n_steps + i, 0)

    out = pl.pallas_call(
        kernel,
        out_shape=jax.ShapeDtypeStruct((_NCORES, 1, 1), jnp.float32),
        grid=(_NCORES, n_steps),
        in_specs=[
            pl.BlockSpec((bt, slab), row_map),   # x slab tile (f32)
            pl.BlockSpec((bt, slab), row_map),   # expanded labels tile (int8)
        ],
        # Constant block index across the reduction axis -> per-core resident
        # (1,1,1) partial, written once on the last step.
        out_specs=pl.BlockSpec((1, 1, 1), lambda c, i: (c, 0, 0)),
        scratch_shapes=[pltpu.VMEM((8, slab), jnp.float32)],
        compiler_params=pltpu.CompilerParams(
            dimension_semantics=("parallel", "arbitrary"),
        ),
    )(x2, t2)

    # Sum the (at most 2) per-core partials; each is already scaled by 1/(B*C).
    return jnp.sum(out)


def _reference(x, y, num_classes=10):
    onehot = jax.nn.one_hot(y, num_classes, dtype=jnp.float32)
    return jnp.mean((x.astype(jnp.float32) - onehot) ** 2)


if __name__ == "__main__":
    key = jax.random.PRNGKey(0)
    C = 10

    # Primary small case (matches the module's usage: logits [B, 10], labels [B]).
    B = 64
    kx, ky = jax.random.split(key)
    x = jax.random.normal(kx, (B, C), dtype=jnp.float32)
    y = jax.random.randint(ky, (B,), 0, C, dtype=jnp.int32)
    loss = jax.block_until_ready(mse_loss_onehot(x, y, num_classes=C))
    ref = _reference(x, y, C)
    assert loss.shape == ()
    assert jnp.allclose(loss, ref, atol=1e-5, rtol=1e-5), f"{loss} vs {ref}"

    # Ragged batch (exercises wrapper-side zero/invalid-class padding).
    B2 = 203
    kx2, ky2 = jax.random.split(ky)
    x2 = jax.random.normal(kx2, (B2, C), dtype=jnp.float32)
    y2 = jax.random.randint(ky2, (B2,), 0, C, dtype=jnp.int32)
    loss2 = jax.block_until_ready(mse_loss_onehot(x2, y2, num_classes=C))
    assert jnp.allclose(loss2, _reference(x2, y2, C), atol=1e-5, rtol=1e-5)

    # Multi-step reduction path (small block rows -> >1 step per core),
    # exercising the init/accumulate/finalize logic across grid steps.
    B3 = 5000
    kx3, ky3 = jax.random.split(ky2)
    x3 = jax.random.normal(kx3, (B3, C), dtype=jnp.float32)
    y3 = jax.random.randint(ky3, (B3,), 0, C, dtype=jnp.int32)
    loss3 = jax.block_until_ready(
        mse_loss_onehot(x3, y3, num_classes=C, target_block_rows=32)
    )
    assert jnp.allclose(loss3, _reference(x3, y3, C), atol=1e-5, rtol=1e-5)

    print("KERNEL_OK")
</pallas_src>

<mosaic_0001>
module attributes {stable_mosaic.version = 11 : i64} {
  func.func @_mse_onehot_kernel(%arg0: i32, %arg1: i32, %arg2: memref<32x640xf32, #tpu.memory_space<vmem>>, %arg3: memref<32x640xi8, #tpu.memory_space<vmem>>, %arg4: memref<1x1x1xf32, #tpu.memory_space<vmem>>, %arg5: memref<8x640xf32, #tpu.memory_space<vmem>>) attributes {dimension_semantics = [#tpu.dimension_semantics<parallel>, #tpu.dimension_semantics<arbitrary>], iteration_bounds = array<i64: 2, 1>, scalar_prefetch = 0 : i64, scratch_operands = 1 : i64, tpu.core_type = #tpu.core_type<tc>, window_params = [{transform_indices = @transform_0, window_bounds = array<i64: 32, 640>}, {transform_indices = @transform_1, window_bounds = array<i64: 32, 640>}, {transform_indices = @transform_2, window_bounds = array<i64: 1, 1, 1>}]} {
    %c0_i32 = arith.constant 0 : i32
    %0 = arith.cmpi eq, %arg1, %c0_i32 : i32
    %1 = arith.extui %0 : i1 to i32
    %c0_i32_0 = arith.constant 0 : i32
    %2 = arith.cmpi ne, %1, %c0_i32_0 : i32
    scf.if %2 {
      %cst_15 = arith.constant 0.000000e+00 : f32
      %37 = vector.broadcast %cst_15 : f32 to vector<8x640xf32>
      %c0_16 = arith.constant 0 : index
      %c0_17 = arith.constant 0 : index
      %38 = vector.load %arg5[%c0_16, %c0_17] : memref<8x640xf32, #tpu.memory_space<vmem>>, vector<8x640xf32>
      tpu.vector_store %arg5[%c0_16, %c0_17], %37 {strides = array<i32>} : memref<8x640xf32, #tpu.memory_space<vmem>>, vector<8x640xf32>,
    } else {
    }
    %c0 = arith.constant 0 : index
    %c0_1 = arith.constant 0 : index
    %3 = vector.load %arg2[%c0, %c0_1] : memref<32x640xf32, #tpu.memory_space<vmem>>, vector<32x640xf32>
    %c0_2 = arith.constant 0 : index
    %c0_3 = arith.constant 0 : index
    %4 = vector.load %arg3[%c0_2, %c0_3] : memref<32x640xi8, #tpu.memory_space<vmem>>, vector<32x640xi8>
    %5 = arith.extsi %4 : vector<32x640xi8> to vector<32x640xi32>
    %6 = tpu.iota {dimensions = array<i32: 1>} : vector<1x640xi32>
    %c10_i32 = arith.constant 10 : i32
    %c0_i32_4 = arith.constant 0 : i32
    %7 = arith.cmpi eq, %c10_i32, %c0_i32_4 : i32
    %c1_i32 = arith.constant 1 : i32
    %8 = arith.select %7, %c1_i32, %c10_i32 : i32
    %9 = vector.broadcast %8 : i32 to vector<1x640xi32>
    %10 = arith.remsi %6, %9 : vector<1x640xi32>
    %c0_i32_5 = arith.constant 0 : i32
    %11 = vector.broadcast %c0_i32_5 : i32 to vector<1x640xi32>
    %12 = arith.cmpi ne, %10, %11 : vector<1x640xi32>
    %c0_i32_6 = arith.constant 0 : i32
    %13 = vector.broadcast %c0_i32_6 : i32 to vector<1x640xi32>
    %14 = arith.cmpi slt, %10, %13 : vector<1x640xi32>
    %c0_i32_7 = arith.constant 0 : i32
    %15 = arith.cmpi slt, %8, %c0_i32_7 : i32
    %16 = vector.broadcast %15 : i1 to vector<1x640xi1>
    %17 = vector.broadcast %16 : vector<1x640xi1> to vector<1x640xi1>
    %18 = arith.xori %14, %17 : vector<1x640xi1>
    %19 = arith.andi %18, %12 : vector<1x640xi1>
    %20 = vector.broadcast %8 : i32 to vector<1x640xi32>
    %21 = arith.addi %10, %20 : vector<1x640xi32>
    %22 = arith.select %19, %21, %10 : vector<1x640xi1>, vector<1x640xi32>
    %23 = vector.broadcast %22 : vector<1x640xi32> to vector<32x640xi32>
    %24 = arith.cmpi eq, %23, %5 : vector<32x640xi32>
    %cst = arith.constant 1.000000e+00 : f32
    %25 = vector.broadcast %cst : f32 to vector<32x640xf32>
    %26 = arith.subf %3, %25 : vector<32x640xf32>
    %27 = arith.select %24, %26, %3 : vector<32x640xi1>, vector<32x640xf32>
    %28 = arith.mulf %27, %27 : vector<32x640xf32>
    %c0_8 = arith.constant 0 : index
    %c0_9 = arith.constant 0 : index
    %29 = vector.load %arg5[%c0_8, %c0_9] : memref<8x640xf32, #tpu.memory_space<vmem>>, vector<8x640xf32>
    %30 = vector.shape_cast %28 : vector<32x640xf32> to vector<4x8x640xf32>
    %cst_10 = arith.constant dense<0.000000e+00> : vector<8x640xf32>
    %31 = vector.multi_reduction <add>, %30, %cst_10 [0] : vector<4x8x640xf32> to vector<8x640xf32>
    %32 = arith.addf %29, %31 : vector<8x640xf32>
    %c0_11 = arith.constant 0 : index
    %c0_12 = arith.constant 0 : index
    %33 = vector.load %arg5[%c0_11, %c0_12] : memref<8x640xf32, #tpu.memory_space<vmem>>, vector<8x640xf32>
    tpu.vector_store %arg5[%c0_11, %c0_12], %32 {strides = array<i32>} : memref<8x640xf32, #tpu.memory_space<vmem>>, vector<8x640xf32>,
    %c0_i32_13 = arith.constant 0 : i32
    %34 = arith.cmpi eq, %arg1, %c0_i32_13 : i32
    %35 = arith.extui %34 : i1 to i32
    %c0_i32_14 = arith.constant 0 : i32
    %36 = arith.cmpi ne, %35, %c0_i32_14 : i32
    scf.if %36 {
      %c0_15 = arith.constant 0 : index
      %c0_16 = arith.constant 0 : index
      %37 = vector.load %arg5[%c0_15, %c0_16] : memref<8x640xf32, #tpu.memory_space<vmem>>, vector<8x640xf32>
      %38 = vector.shape_cast %37 : vector<8x640xf32> to vector<1x8x640xf32>
      %cst_17 = arith.constant dense<0.000000e+00> : vector<1xf32>
      %39 = vector.multi_reduction <add>, %38, %cst_17 [1, 2] : vector<1x8x640xf32> to vector<1xf32>
      %40 = vector.shape_cast %39 : vector<1xf32> to vector<1x1x1xf32>
      %41 = vector.extract %40[0, 0, 0] : f32 from vector<1x1x1xf32>
      %cst_18 = arith.constant 1.562500e-03 : f32
      %42 = arith.mulf %41, %cst_18 : f32
      %43 = vector.broadcast %42 : f32 to vector<1x1x1xf32>
      %c0_19 = arith.constant 0 : index
      %c0_20 = arith.constant 0 : index
      %c0_21 = arith.constant 0 : index
      %44 = vector.load %arg4[%c0_19, %c0_20, %c0_21] : memref<1x1x1xf32, #tpu.memory_space<vmem>>, vector<1x1x1xf32>
      tpu.vector_store %arg4[%c0_19, %c0_20, %c0_21], %43 {strides = array<i32>} : memref<1x1x1xf32, #tpu.memory_space<vmem>>, vector<1x1x1xf32>,
    } else {
    }
    return
  }
  func.func @transform_0(%arg0: i32, %arg1: i32) -> (i32, i32) {
    %c1_i32 = arith.constant 1 : i32
    %0 = arith.muli %arg0, %c1_i32 : i32
    %1 = arith.addi %0, %arg1 : i32
    %c0_i32 = arith.constant 0 : i32
    %c0_i32_0 = arith.constant 0 : i32
    return %1, %c0_i32 : i32, i32
  }
  func.func @transform_1(%arg0: i32, %arg1: i32) -> (i32, i32) {
    %c1_i32 = arith.constant 1 : i32
    %0 = arith.muli %arg0, %c1_i32 : i32
    %1 = arith.addi %0, %arg1 : i32
    %c0_i32 = arith.constant 0 : i32
    %c0_i32_0 = arith.constant 0 : i32
    return %1, %c0_i32 : i32, i32
  }
  func.func @transform_2(%arg0: i32, %arg1: i32) -> (i32, i32, i32) {
    %c0_i32 = arith.constant 0 : i32
    %c0_i32_0 = arith.constant 0 : i32
    %c0_i32_1 = arith.constant 0 : i32
    return %arg0, %c0_i32, %c0_i32_0 : i32, i32, i32
  }
}

</mosaic_0001>

<llo_original>
// kernel: tpu_custom_call.1
$region0: #{tpu_custom_call.1}
  #allocation0 [shape = 'u32[]', space=smem, size = 0x4, offset = 0x4, fixed_abs, tag = 'smem constant byte address 0x4 - core index']
  #allocation1 [shape = 'u32[144,128]{1,0:T(1,128)}', space=vmem, size = 0x12000, scoped, tag = 'internal scratch']
  #allocation2 [shape = 'f32[8,640]{1,0:T(8,128)}', space=vmem, size = 0x5000, scoped, tag = 'scratch operand']
  %s0 = inlined_call_operand.hbm [shape: f32[64,640], index: 0, kind: input, shape index: {}]
  %s1 = inlined_call_operand.hbm [shape: s8[64,640], index: 1, kind: input, shape index: {}]
  %s2 = inlined_call_operand.vmem [shape: f32[2,1,1], index: 2, kind: output, shape index: {}]
  %s3 = sld [smem:[#allocation0]]
  $region57: #{tpu_custom_call.1} parent=0
    _
  %s5 = ssub.s32 1, %s3
  %s6 = scalar_select 0, %s5, %s3
  $region1: #{tpu_custom_call.1} parent=0
    #allocation3 [shape = 'u8[163840]{0}', space=vmem, size = 0x28000, scoped, tag = 'input window, operand 0']
    #allocation4 [shape = 's32[2]{0}', space=sflag, size = 0x8, scoped, tag = 'scoped memory for tpu_custom_call.1']
    #allocation5 [shape = 'u8[40960]{0}', space=vmem, size = 0xa000, scoped, tag = 'input window, operand 1']
    #allocation6 [shape = 's32[2]{0}', space=sflag, size = 0x8, scoped, tag = 'scoped memory for tpu_custom_call.1']
    %7 = vsyncpa [#allocation4], 0
    %s8 = scalar_lea.sflag [#allocation4], 1
    %9 = vsyncpa %s8, 0
    %10 = vsyncpa [#allocation6], 0
    %s11 = scalar_lea.sflag [#allocation6], 1
    %12 = vsyncpa %s11, 0
    loop: start=0, step=1, limit=4
    $region2: #{tpu_custom_call.1} parent=1 // loop_pre_header
      _
    $region3: #{tpu_custom_call.1} parent=1 // loop_header
      %s14 = sphi 0, %s18
      %p15 = scmp.ge.s32.totalorder %s14, 4
      %s21 = sphi 0, %s33
      %s22 = sphi 0, %s29
      %s23 = sphi 0, %s21
      %s24 = sphi 0, %s22
      %s25 = sphi 0, %s23
      %s26 = sphi 0, %s24
      %s38 = sphi 0, %s40
      %s41 = sphi 0, %s38
      %s42 = sphi 0, %s41
      %s58 = sphi 0, %s42
      %s66 = sphi 0, %s68
      %s69 = sphi 0, %s66
      %s70 = sphi 0, %s69
      %s86 = sphi 0, %s70
      %s92 = sphi 0, %s94
      %s95 = sphi 0, %s92
      %s96 = sphi 0, %s95
      %s112 = sphi 0, %s96
    $region4: #{tpu_custom_call.1} parent=1 // loop_header_branch
      %17 = sbr.rel (%p15) target = $region8
    $region5: #{tpu_custom_call.1} parent=1 // loop_body
      %s19 = ssub.s32 %s14, 1
      %s20 = ssub.s32 %s14, 2
      %s27 = sadd.s32 1, %s22
      %p28 = scmp.ge.s32.totalorder %s27, 1
      %s29 = scalar_select %p28, 0, %s27
      %s30 = sadd.s32 1, %s21
      %s31 = scalar_select %p28, %s30, %s21
      %p32 = scmp.ge.s32.totalorder %s31, 2
      %s33 = scalar_select %p32, 0, %s31
      %s34 = sadd.s32 %s21, %s22
      %s35 = sadd.s32 %s33, %s29
      %s36 = ssub.s32 %s34, %s35
      %p37 = scmp.eq.s32.totalorder %s36, 0
      %s39 = sadd.s32 %s38, 1
      %s40 = scalar_select %p37, %s38, %s39
      %p43 = pneg %p37
      %p44 = scmp.eq.s32.totalorder %s14, 1
      %p45 = por %p43, %p44
      %p46 = scmp.ne.s32.totalorder %s38, %s41
      %p47 = scmp.eq.s32.totalorder %s14, 0
      %p48 = por %p46, %p47
      %p49 = scmp.ne.s32.totalorder %s38, %s41
      %p50 = scmp.eq.s32.totalorder %s19, 1
      %p51 = por %p49, %p50
      %p52 = scmp.ne.s32.totalorder %s41, %s42
      %p53 = scmp.eq.s32.totalorder %s19, 0
      %p54 = por %p52, %p53
      %p55 = scmp.ne.s32.totalorder %s41, %s42
      %p56 = scmp.eq.s32.totalorder %s20, 1
      %p57 = por %p55, %p56
      %p59 = scmp.ne.s32.totalorder %s42, %s58
      %p60 = scmp.eq.s32.totalorder %s20, 0
      %p61 = por %p59, %p60
      %s62 = sadd.s32 %s21, %s22
      %s63 = sadd.s32 %s33, %s29
      %s64 = ssub.s32 %s62, %s63
      %p65 = scmp.eq.s32.totalorder %s64, 0
      %s67 = sadd.s32 %s66, 1
      %s68 = scalar_select %p65, %s66, %s67
      %p71 = pneg %p65
      %p72 = scmp.eq.s32.totalorder %s14, 1
      %p73 = por %p71, %p72
      %p74 = scmp.ne.s32.totalorder %s66, %s69
      %p75 = scmp.eq.s32.totalorder %s14, 0
      %p76 = por %p74, %p75
      %p77 = scmp.ne.s32.totalorder %s66, %s69
      %p78 = scmp.eq.s32.totalorder %s19, 1
      %p79 = por %p77, %p78
      %p80 = scmp.ne.s32.totalorder %s69, %s70
      %p81 = scmp.eq.s32.totalorder %s19, 0
      %p82 = por %p80, %p81
      %p83 = scmp.ne.s32.totalorder %s69, %s70
      %p84 = scmp.eq.s32.totalorder %s20, 1
      %p85 = por %p83, %p84
      %p87 = scmp.ne.s32.totalorder %s70, %s86
      %p88 = scmp.eq.s32.totalorder %s20, 0
      %p89 = por %p87, %p88
      %s90 = ssub.s32 %s21, %s33
      %p91 = scmp.eq.s32.totalorder %s90, 0
      %s93 = sadd.s32 %s92, 1
      %s94 = scalar_select %p91, %s92, %s93
      %p97 = pneg %p91
      %p98 = scmp.eq.s32.totalorder %s14, 1
      %p99 = por %p97, %p98
      %p100 = scmp.ne.s32.totalorder %s92, %s95
      %p101 = scmp.eq.s32.totalorder %s14, 0
      %p102 = por %p100, %p101
      %p103 = scmp.ne.s32.totalorder %s92, %s95
      %p104 = scmp.eq.s32.totalorder %s19, 1
      %p105 = por %p103, %p104
      %p106 = scmp.ne.s32.totalorder %s95, %s96
      %p107 = scmp.eq.s32.totalorder %s19, 0
      %p108 = por %p106, %p107
      %p109 = scmp.ne.s32.totalorder %s95, %s96
      %p110 = scmp.eq.s32.totalorder %s20, 1
      %p111 = por %p109, %p110
      %p113 = scmp.ne.s32.totalorder %s96, %s112
      %p114 = scmp.eq.s32.totalorder %s20, 0
      %p115 = por %p113, %p114
      %p116 = scmp.le.s32.totalorder 1, %s14
      %p117 = scmp.lt.s32.totalorder %s14, 3
      %p118 = pnand %p116, %p117
      %p119 = pneg %p118
      // Predicated region
      $region9: #{tpu_custom_call.1} parent=5 // pred_check
        _
      $region10: #{tpu_custom_call.1} parent=5 // pred_check_branch
        %121 = sbr.rel (%p118) target = $region12
      $region11: #{tpu_custom_call.1} parent=5 // pred_region
        %s122 = ssub.s32 %s14, 1
      $region12: #{tpu_custom_call.1} parent=5 // pred_fallthru
        _
      %p123 = scmp.lt.s32.totalorder %s14, 2
      // Predicated region
      $region13: #{tpu_custom_call.1} parent=5 // pred_check
        %p124 = pneg %p123
      $region14: #{tpu_custom_call.1} parent=5 // pred_check_branch
        %126 = sbr.rel (%p124) target = $region16
      $region15: #{tpu_custom_call.1} parent=5 // pred_region
        // Predicated region
        $region17: #{tpu_custom_call.1} parent=15 // pred_check
          %p127 = pneg %p48
        $region18: #{tpu_custom_call.1} parent=15 // pred_check_branch
          %129 = sbr.rel (%p127) target = $region20
        $region19: #{tpu_custom_call.1} parent=15 // pred_region
          %s130 = sand.u32 %s38, 1
          %s131 = scalar_lea.sflag [#allocation4], %s130
          %s132 = sand.u32 %s38, 1
          %s133 = smul.addr %s132, 160
          %s134 = scalar_lea.vmem [#allocation3], %s133
          %s135 = sadd.s32 %s21, %s22
          %s136 = smul.u32 4, %s135
          %s138 = ssub.s32 2560, 2560
          %139 = vsyncadd %s131, %s138
          %s140 = smul.addr %s136, 5
          %s141 = smul.addr %s140, 128
          %s142 = scalar_lea.hbm %s0, %s141
          %s143 = sshll.u32 %s134, 4
          %s144 = int_to_ptr.vmem [resolvable:$true] %s143
          %149 = dma.hbm_to_vmem [thread:$0]  %s142, 2560, %s144, %s131, 640, 640, 40
        $region20: #{tpu_custom_call.1} parent=15 // pred_fallthru
          _
        // Predicated region
        $region21: #{tpu_custom_call.1} parent=15 // pred_check
          %p150 = pneg %p76
        $region22: #{tpu_custom_call.1} parent=15 // pred_check_branch
          %152 = sbr.rel (%p150) target = $region24
        $region23: #{tpu_custom_call.1} parent=15 // pred_region
          %s153 = sand.u32 %s66, 1
          %s154 = scalar_lea.sflag [#allocation6], %s153
          %s155 = sand.u32 %s66, 1
          %s156 = smul.addr %s155, 40
          %s157 = scalar_lea.vmem [#allocation5], %s156
          %s158 = sadd.s32 %s21, %s22
          %s160 = ssub.s32 640, 640
          %161 = vsyncadd %s154, %s160
          %s162 = smul.addr %s158, 5
          %s163 = smul.addr %s162, 128
          %s164 = scalar_lea.hbm %s1, %s163
          %s166 = sshll.u32 %s157, 4
          %s167 = int_to_ptr.vmem [resolvable:$true] %s166
          %169 = dma.hbm_to_vmem [thread:$0]  %s164, 640, %s167, %s154
        $region24: #{tpu_custom_call.1} parent=15 // pred_fallthru
          _
      $region16: #{tpu_custom_call.1} parent=5 // pred_fallthru
        _
      %p170 = scmp.le.s32.totalorder 1, %s14
      %p171 = scmp.lt.s32.totalorder %s14, 3
      %p172 = pnand %p170, %p171
      %p173 = pneg %p172
      // Predicated region
      $region25: #{tpu_custom_call.1} parent=5 // pred_check
        _
      $region26: #{tpu_custom_call.1} parent=5 // pred_check_branch
        %175 = sbr.rel (%p172) target = $region28
      $region27: #{tpu_custom_call.1} parent=5 // pred_region
        %s176 = ssub.s32 %s14, 1
        %s177 = sand.u32 %s41, 1
        %s178 = scalar_lea.sflag [#allocation4], %s177
        %s179 = sand.u32 %s41, 1
        %s180 = smul.addr %s179, 160
        %s181 = scalar_lea.vmem [#allocation3], %s180
        // Predicated region
        $region29: #{tpu_custom_call.1} parent=27 // pred_check
          %p182 = pneg %p54
        $region30: #{tpu_custom_call.1} parent=27 // pred_check_branch
          %184 = sbr.rel (%p182) target = $region32
        $region31: #{tpu_custom_call.1} parent=27 // pred_region
          %185 = dma.done %s178, 2560
        $region32: #{tpu_custom_call.1} parent=27 // pred_fallthru
          _
        %s186 = sand.u32 %s69, 1
        %s187 = scalar_lea.sflag [#allocation6], %s186
        %s188 = sand.u32 %s69, 1
        %s189 = smul.addr %s188, 40
        %s190 = scalar_lea.vmem [#allocation5], %s189
        // Predicated region
        $region33: #{tpu_custom_call.1} parent=27 // pred_check
          %p191 = pneg %p82
        $region34: #{tpu_custom_call.1} parent=27 // pred_check_branch
          %193 = sbr.rel (%p191) target = $region36
        $region35: #{tpu_custom_call.1} parent=27 // pred_region
          %194 = dma.done %s187, 640
        $region36: #{tpu_custom_call.1} parent=27 // pred_fallthru
          _
        %s195 = sand.u32 %s41, 1
        %s196 = scalar_lea.sflag [#allocation4], %s195
        %s197 = sand.u32 %s41, 1
        %s198 = smul.addr %s197, 160
        %s199 = scalar_lea.vmem [#allocation3], %s198
        %p200 = pneg %p54
        %p201 = pneg %p51
        %s202 = sand.u32 %s69, 1
        %s203 = scalar_lea.sflag [#allocation6], %s202
        %s204 = sand.u32 %s69, 1
        %s205 = smul.addr %s204, 40
        %s206 = scalar_lea.vmem [#allocation5], %s205
        %p207 = pneg %p82
        %p208 = pneg %p79
        %p209 = pneg %p108
        %p210 = pneg %p105
        %p211 = scmp.lt.s32.totalorder %s23, 1
        %s212 = scalar_select %p211, %s23, 1
        %s213 = scalar_lea.vmem %s2, %s212
        %s214 = sadd.s32 %s23, %s24
        %s215 = smul.u32 4, %s214
        %s216 = sadd.s32 %s23, %s24
        %p217 = scmp.lt.s32.totalorder %s23, 1
        %s218 = scalar_select %p217, %s23, 1
        %s219 = scalar_lea.vmem %s2, %s218
        %p220 = scmp.eq.s32.totalorder %s24, 0
        // Predicated region
        $region37: #{tpu_custom_call.1} parent=27 // pred_check
          %p221 = pneg %p220
        $region38: #{tpu_custom_call.1} parent=27 // pred_check_branch
          %223 = sbr.rel (%p221) target = $region40
        $region39: #{tpu_custom_call.1} parent=27 // pred_region
          %224 = vst [vmem:[#allocation2] sm:$0xff] 0.0
          %225 = vst [vmem:[#allocation2 + $0x8] sm:$0xff] 0.0
          %226 = vst [vmem:[#allocation2 + $0x10] sm:$0xff] 0.0
          %227 = vst [vmem:[#allocation2 + $0x18] sm:$0xff] 0.0
          %228 = vst [vmem:[#allocation2 + $0x20] sm:$0xff] 0.0
        $region40: #{tpu_custom_call.1} parent=27 // pred_fallthru
          _
        %v229 = vld [vmem:[%s181] sm:$0xff]
        %v230 = vld [vmem:[%s181 + $0x8] sm:$0xff]
        %v231 = vld [vmem:[%s181 + $0x10] sm:$0xff]
        %v232 = vld [vmem:[%s181 + $0x18] sm:$0xff]
        %v233 = vld [vmem:[%s181 + $0x20] sm:$0xff]
        %v234 = vld [vmem:[%s181 + $0x28] sm:$0xff]
        %v235 = vld [vmem:[%s181 + $0x30] sm:$0xff]
        %v236 = vld [vmem:[%s181 + $0x38] sm:$0xff]
        %v237 = vld [vmem:[%s181 + $0x40] sm:$0xff]
        %v238 = vld [vmem:[%s181 + $0x48] sm:$0xff]
        %v239 = vld [vmem:[%s181 + $0x50] sm:$0xff]
        %v240 = vld [vmem:[%s181 + $0x58] sm:$0xff]
        %v241 = vld [vmem:[%s181 + $0x60] sm:$0xff]
        %v242 = vld [vmem:[%s181 + $0x68] sm:$0xff]
        %v243 = vld [vmem:[%s181 + $0x70] sm:$0xff]
        %v244 = vld [vmem:[%s181 + $0x78] sm:$0xff]
        %v245 = vld [vmem:[%s181 + $0x80] sm:$0xff]
        %v246 = vld [vmem:[%s181 + $0x88] sm:$0xff]
        %v247 = vld [vmem:[%s181 + $0x90] sm:$0xff]
        %v248 = vld [vmem:[%s181 + $0x98] sm:$0xff]
        %v249 = vld [vmem:[%s190] sm:$0xff]
        %v250 = vld [vmem:[%s190 + $0x8] sm:$0xff]
        %v251 = vld [vmem:[%s190 + $0x10] sm:$0xff]
        %v252 = vld [vmem:[%s190 + $0x18] sm:$0xff]
        %v253 = vld [vmem:[%s190 + $0x20] sm:$0xff]
        %v254 = vunpack.c.0.s8 %v249
        %v255 = vunpack.c.0.s8 %v250
        %v256 = vunpack.c.0.s8 %v251
        %v257 = vunpack.c.0.s8 %v252
        %v258 = vunpack.c.0.s8 %v253
        %v259 = vunpack.c.1.s8 %v249
        %v260 = vunpack.c.1.s8 %v250
        %v261 = vunpack.c.1.s8 %v251
        %v262 = vunpack.c.1.s8 %v252
        %v263 = vunpack.c.1.s8 %v253
        %v264 = vunpack.c.2.s8 %v249
        %v265 = vunpack.c.2.s8 %v250
        %v266 = vunpack.c.2.s8 %v251
        %v267 = vunpack.c.2.s8 %v252
        %v268 = vunpack.c.2.s8 %v253
        %v269 = vunpack.c.3.s8 %v249
        %v270 = vunpack.c.3.s8 %v250
        %v271 = vunpack.c.3.s8 %v251
        %v272 = vunpack.c.3.s8 %v252
        %v273 = vunpack.c.3.s8 %v253
        %v274 = vlaneseq
        %v275 = vand.u32 %v274, 127
        %v276 = vadd.s32 %v275, 128
        %v277 = vadd.s32 %v275, 256
        %v278 = vadd.s32 %v275, 384
        %v279 = vadd.s32 %v275, 512
        %vm280 = vcmp.lt.s32.totalorder %v275, 0
        %v281 = vsub.s32 0, %v275
        %v282 = vsel %vm280, %v281, %v275
        %v283 = vmul.u32.u64.compose %v282, 3435973837
        %v284 = vextract.low.u32 %v283
        %v285 = vextract.high.u32 %v283
        %v286 = vshrl.u32 %v285, 3
        %v287 = vmul.u32 %v286, 10
        %v288 = vsub.s32 %v282, %v287
        %v289 = vsub.s32 0, %v288
        %v290 = vsel %vm280, %v289, %v288
        %vm291 = vcmp.lt.s32.totalorder %v276, 0
        %v292 = vsub.s32 0, %v276
        %v293 = vsel %vm291, %v292, %v276
        %v294 = vmul.u32.u64.compose %v293, 3435973837
        %v295 = vextract.low.u32 %v294
        %v296 = vextract.high.u32 %v294
        %v297 = vshrl.u32 %v296, 3
        %v298 = vmul.u32 %v297, 10
        %v299 = vsub.s32 %v293, %v298
        %v300 = vsub.s32 0, %v299
        %v301 = vsel %vm291, %v300, %v299
        %vm302 = vcmp.lt.s32.totalorder %v277, 0
        %v303 = vsub.s32 0, %v277
        %v304 = vsel %vm302, %v303, %v277
        %v305 = vmul.u32.u64.compose %v304, 3435973837
        %v306 = vextract.low.u32 %v305
        %v307 = vextract.high.u32 %v305
        %v308 = vshrl.u32 %v307, 3
        %v309 = vmul.u32 %v308, 10
        %v310 = vsub.s32 %v304, %v309
        %v311 = vsub.s32 0, %v310
        %v312 = vsel %vm302, %v311, %v310
        %vm313 = vcmp.lt.s32.totalorder %v278, 0
        %v314 = vsub.s32 0, %v278
        %v315 = vsel %vm313, %v314, %v278
        %v316 = vmul.u32.u64.compose %v315, 3435973837
        %v317 = vextract.low.u32 %v316
        %v318 = vextract.high.u32 %v316
        %v319 = vshrl.u32 %v318, 3
        %v320 = vmul.u32 %v319, 10
        %v321 = vsub.s32 %v315, %v320
        %v322 = vsub.s32 0, %v321
        %v323 = vsel %vm313, %v322, %v321
        %vm324 = vcmp.lt.s32.totalorder %v279, 0
        %v325 = vsub.s32 0, %v279
        %v326 = vsel %vm324, %v325, %v279
        %v327 = vmul.u32.u64.compose %v326, 3435973837
        %v328 = vextract.low.u32 %v327
        %v329 = vextract.high.u32 %v327
        %v330 = vshrl.u32 %v329, 3
        %v331 = vmul.u32 %v330, 10
        %v332 = vsub.s32 %v326, %v331
        %v333 = vsub.s32 0, %v332
        %v334 = vsel %vm324, %v333, %v332
        %vm335 = vcmp.ne.s32.totalorder %v290, 0
        %vm336 = vcmp.ne.s32.totalorder %v301, 0
        %vm337 = vcmp.ne.s32.totalorder %v312, 0
        %vm338 = vcmp.ne.s32.totalorder %v323, 0
        %vm339 = vcmp.ne.s32.totalorder %v334, 0
        %vm340 = vcmp.lt.s32.totalorder %v290, 0
        %vm341 = vcmp.lt.s32.totalorder %v301, 0
        %vm342 = vcmp.lt.s32.totalorder %v312, 0
        %vm343 = vcmp.lt.s32.totalorder %v323, 0
        %vm344 = vcmp.lt.s32.totalorder %v334, 0
        %vm345 = vmand %vm340, %vm335
        %vm346 = vmand %vm341, %vm336
        %vm347 = vmand %vm342, %vm337
        %vm348 = vmand %vm343, %vm338
        %vm349 = vmand %vm344, %vm339
        %v350 = vadd.s32 %v290, 10
        %v351 = vadd.s32 %v301, 10
        %v352 = vadd.s32 %v312, 10
        %v353 = vadd.s32 %v323, 10
        %v354 = vadd.s32 %v334, 10
        %v355 = vsel %vm345, %v350, %v290
        %v356 = vsel %vm346, %v351, %v301
        %v357 = vsel %vm347, %v352, %v312
        %v358 = vsel %vm348, %v353, %v323
        %v359 = vsel %vm349, %v354, %v334
        %vm360 = vcmp.eq.s32.totalorder %v355, %v254
        %vm361 = vcmp.eq.s32.totalorder %v356, %v255
        %vm362 = vcmp.eq.s32.totalorder %v357, %v256
        %vm363 = vcmp.eq.s32.totalorder %v358, %v257
        %vm364 = vcmp.eq.s32.totalorder %v359, %v258
        %vm365 = vcmp.eq.s32.totalorder %v355, %v259
        %vm366 = vcmp.eq.s32.totalorder %v356, %v260
        %vm367 = vcmp.eq.s32.totalorder %v357, %v261
        %vm368 = vcmp.eq.s32.totalorder %v358, %v262
        %vm369 = vcmp.eq.s32.totalorder %v359, %v263
        %vm370 = vcmp.eq.s32.totalorder %v355, %v264
        %vm371 = vcmp.eq.s32.totalorder %v356, %v265
        %vm372 = vcmp.eq.s32.totalorder %v357, %v266
        %vm373 = vcmp.eq.s32.totalorder %v358, %v267
        %vm374 = vcmp.eq.s32.totalorder %v359, %v268
        %vm375 = vcmp.eq.s32.totalorder %v355, %v269
        %vm376 = vcmp.eq.s32.totalorder %v356, %v270
        %vm377 = vcmp.eq.s32.totalorder %v357, %v271
        %vm378 = vcmp.eq.s32.totalorder %v358, %v272
        %vm379 = vcmp.eq.s32.totalorder %v359, %v273
        %v380 = vsub.f32 %v229, 1.0
        %v381 = vsub.f32 %v230, 1.0
        %v382 = vsub.f32 %v231, 1.0
        %v383 = vsub.f32 %v232, 1.0
        %v384 = vsub.f32 %v233, 1.0
        %v385 = vsub.f32 %v234, 1.0
        %v386 = vsub.f32 %v235, 1.0
        %v387 = vsub.f32 %v236, 1.0
        %v388 = vsub.f32 %v237, 1.0
        %v389 = vsub.f32 %v238, 1.0
        %v390 = vsub.f32 %v239, 1.0
        %v391 = vsub.f32 %v240, 1.0
        %v392 = vsub.f32 %v241, 1.0
        %v393 = vsub.f32 %v242, 1.0
        %v394 = vsub.f32 %v243, 1.0
        %v395 = vsub.f32 %v244, 1.0
        %v396 = vsub.f32 %v245, 1.0
        %v397 = vsub.f32 %v246, 1.0
        %v398 = vsub.f32 %v247, 1.0
        %v399 = vsub.f32 %v248, 1.0
        %v400 = vsel %vm360, %v380, %v229
        %v401 = vsel %vm361, %v381, %v230
        %v402 = vsel %vm362, %v382, %v231
        %v403 = vsel %vm363, %v383, %v232
        %v404 = vsel %vm364, %v384, %v233
        %v405 = vsel %vm365, %v385, %v234
        %v406 = vsel %vm366, %v386, %v235
        %v407 = vsel %vm367, %v387, %v236
        %v408 = vsel %vm368, %v388, %v237
        %v409 = vsel %vm369, %v389, %v238
        %v410 = vsel %vm370, %v390, %v239
        %v411 = vsel %vm371, %v391, %v240
        %v412 = vsel %vm372, %v392, %v241
        %v413 = vsel %vm373, %v393, %v242
        %v414 = vsel %vm374, %v394, %v243
        %v415 = vsel %vm375, %v395, %v244
        %v416 = vsel %vm376, %v396, %v245
        %v417 = vsel %vm377, %v397, %v246
        %v418 = vsel %vm378, %v398, %v247
        %v419 = vsel %vm379, %v399, %v248
        %v420 = vmul.f32 %v400, %v400
        %v421 = vmul.f32 %v401, %v401
        %v422 = vmul.f32 %v402, %v402
        %v423 = vmul.f32 %v403, %v403
        %v424 = vmul.f32 %v404, %v404
        %v425 = vmul.f32 %v405, %v405
        %v426 = vmul.f32 %v406, %v406
        %v427 = vmul.f32 %v407, %v407
        %v428 = vmul.f32 %v408, %v408
        %v429 = vmul.f32 %v409, %v409
        %v430 = vmul.f32 %v410, %v410
        %v431 = vmul.f32 %v411, %v411
        %v432 = vmul.f32 %v412, %v412
        %v433 = vmul.f32 %v413, %v413
        %v434 = vmul.f32 %v414, %v414
        %v435 = vmul.f32 %v415, %v415
        %v436 = vmul.f32 %v416, %v416
        %v437 = vmul.f32 %v417, %v417
        %v438 = vmul.f32 %v418, %v418
        %v439 = vmul.f32 %v419, %v419
        %v440 = vld [vmem:[#allocation2] sm:$0xff]
        %v441 = vld [vmem:[#allocation2 + $0x8] sm:$0xff]
        %v442 = vld [vmem:[#allocation2 + $0x10] sm:$0xff]
        %v443 = vld [vmem:[#allocation2 + $0x18] sm:$0xff]
        %v444 = vld [vmem:[#allocation2 + $0x20] sm:$0xff]
        %v445 = vadd.f32 %v420, %v425
        %v446 = vadd.f32 %v445, %v430
        %v447 = vadd.f32 %v446, %v435
        %v448 = vadd.f32 %v421, %v426
        %v449 = vadd.f32 %v448, %v431
        %v450 = vadd.f32 %v449, %v436
        %v451 = vadd.f32 %v422, %v427
        %v452 = vadd.f32 %v451, %v432
        %v453 = vadd.f32 %v452, %v437
        %v454 = vadd.f32 %v423, %v428
        %v455 = vadd.f32 %v454, %v433
        %v456 = vadd.f32 %v455, %v438
        %v457 = vadd.f32 %v424, %v429
        %v458 = vadd.f32 %v457, %v434
        %v459 = vadd.f32 %v458, %v439
        %v460 = vadd.f32 %v440, %v447
        %v461 = vadd.f32 %v441, %v450
        %v462 = vadd.f32 %v442, %v453
        %v463 = vadd.f32 %v443, %v456
        %v464 = vadd.f32 %v444, %v459
        %465 = vst [vmem:[#allocation2] sm:$0xff] %v460
        %466 = vst [vmem:[#allocation2 + $0x8] sm:$0xff] %v461
        %467 = vst [vmem:[#allocation2 + $0x10] sm:$0xff] %v462
        %468 = vst [vmem:[#allocation2 + $0x18] sm:$0xff] %v463
        %469 = vst [vmem:[#allocation2 + $0x20] sm:$0xff] %v464
        // Predicated region
        $region41: #{tpu_custom_call.1} parent=27 // pred_check
          %p470 = pneg %p220
        $region42: #{tpu_custom_call.1} parent=27 // pred_check_branch
          %472 = sbr.rel (%p470) target = $region44
        $region43: #{tpu_custom_call.1} parent=27 // pred_region
          %v473 = vld [vmem:[#allocation2] sm:$0xff]
          %v474 = vld [vmem:[#allocation2 + $0x8] sm:$0xff]
          %v475 = vld [vmem:[#allocation2 + $0x10] sm:$0xff]
          %v476 = vld [vmem:[#allocation2 + $0x18] sm:$0xff]
          %v477 = vld [vmem:[#allocation2 + $0x20] sm:$0xff]
          %v478 = vadd.f32 %v473, %v474
          %v479 = vadd.f32 %v478, %v475
          %v480 = vadd.f32 %v479, %v476
          %v481 = vadd.f32 %v480, %v477
          %482 = vadd.xlane.f32.xlu0 %v481
          %v483 = vpop.xlane.xlu0 %482
          %v484 = vrot.slane %v483, 4
          %v485 = vadd.f32 %v483, %v484
          %v486 = vrot.slane %v485, 2
          %v487 = vadd.f32 %v485, %v486
          %v488 = vrot.slane %v487, 1
          %v489 = vadd.f32 %v487, %v488
          %s490 = vtos %v489
          %s491 = smul.f32 %s490, 0.0015625
          %v492 = vstv %s491
          %vm493 = vcmask 0
          %494 = vst.msk [vmem:[%s219] sm:$0x1] %vm493, %v492
        $region44: #{tpu_custom_call.1} parent=27 // pred_fallthru
          _
        %p495 = scmp.lt.s32.totalorder %s23, 1
        %s496 = scalar_select %p495, %s23, 1
        %s497 = scalar_lea.vmem %s2, %s496
        // Predicated region
        $region45: #{tpu_custom_call.1} parent=27 // pred_check
          %p498 = pneg %p105
        $region46: #{tpu_custom_call.1} parent=27 // pred_check_branch
          %500 = sbr.rel (%p498) target = $region48
        $region47: #{tpu_custom_call.1} parent=27 // pred_region
          _
        $region48: #{tpu_custom_call.1} parent=27 // pred_fallthru
          _
      $region28: #{tpu_custom_call.1} parent=5 // pred_fallthru
        _
      %p501 = scmp.le.s32.totalorder 2, %s14
      // Predicated region
      $region49: #{tpu_custom_call.1} parent=5 // pred_check
        %p502 = pneg %p501
      $region50: #{tpu_custom_call.1} parent=5 // pred_check_branch
        %504 = sbr.rel (%p502) target = $region52
      $region51: #{tpu_custom_call.1} parent=5 // pred_region
        %s505 = ssub.s32 %s14, 2
        // Predicated region
        $region53: #{tpu_custom_call.1} parent=51 // pred_check
          %p506 = pneg %p111
        $region54: #{tpu_custom_call.1} parent=51 // pred_check_branch
          %508 = sbr.rel (%p506) target = $region56
        $region55: #{tpu_custom_call.1} parent=51 // pred_region
          %p509 = scmp.lt.s32.totalorder %s25, 1
          %s510 = scalar_select %p509, %s25, 1
          %s511 = scalar_lea.vmem %s2, %s510
        $region56: #{tpu_custom_call.1} parent=51 // pred_fallthru
          _
      $region52: #{tpu_custom_call.1} parent=5 // pred_fallthru
        _
    $region6: #{tpu_custom_call.1} parent=1 // loop_footer
      %s18 = sadd.s32 1, %s14
    $region7: #{tpu_custom_call.1} parent=1 // loop_footer_branch
      %13 = sbr.rel target = $region3
    $region8: #{tpu_custom_call.1} parent=1 // loop_exit
      _
    %512 = vsyncpa [#allocation4], 1
    %s513 = scalar_lea.sflag [#allocation4], 1
    %514 = vsyncpa %s513, 1
    %515 = vsyncpa [#allocation6], 1
    %s516 = scalar_lea.sflag [#allocation6], 1
    %517 = vsyncpa %s516, 1

</llo_original>
